<compile_context>
chip_gen: v6e
topology: v6e:2x2x1
jax: 0.10.0
libtpu: 0.0.40
codegen_flags: <defaults>
</compile_context>

<pallas_src>
import jax
import jax.numpy as jnp
from jax import lax
from jax.experimental import pallas as pl
from jax.experimental.pallas import tpu as pltpu


C = 3  # number of omics channels (fixed by the module)


# ---------------------------------------------------------------------------
# Tiling helpers
# ---------------------------------------------------------------------------
def _vmem_capacity_bytes():
    try:
        return int(pltpu.get_tpu_info().vmem_capacity_bytes)
    except Exception:
        return 64 << 20  # conservative (v7x per-TensorCore VMEM)


def _row_align(dtype):
    # sublane packing: 8 rows for 32-bit, 16 for bf16, 32 for int8/fp8
    return max(8, 32 // jnp.dtype(dtype).itemsize)


def _pick_tile(n, d, dtype):
    cap = _vmem_capacity_bytes()
    if cap >= (96 << 20):           # v5e / v6e: 128 MiB physical VMEM
        target, limit = 4 << 20, 64 << 20
    else:                           # v7x: 64 MiB physical VMEM
        target, limit = 2 << 20, 48 << 20
    align = _row_align(dtype)
    rows = (target // (d * 4)) // align * align
    rows = max(align, rows)
    if rows >= n:
        rows = n
    return rows, limit


# ---------------------------------------------------------------------------
# Path A: VMEM-resident single pass (inputs read from HBM exactly once)
# ---------------------------------------------------------------------------
def _resident_forward(x1, x2, x3, w1, b1, w2, b2):
    N, D = x1.shape
    inv = 1.0 / float(N * D)
    use_slab = (N % 8 == 0) and (N > 8)

    def kernel(x1_ref, x2_ref, x3_ref, w1t_ref, b1_ref, w2_ref, b2_ref, o_ref):
        def cmean(xr):
            x = xr[...].astype(jnp.float32)
            if use_slab:
                # VPU slab accumulation; one XLU reduce only at the end.
                x = jnp.sum(x.reshape(N // 8, 8, D), axis=0)
            s = jnp.sum(jnp.sum(x, axis=1, keepdims=True), axis=0, keepdims=True)
            return s * inv                                     # (1, 1)

        m1, m2, m3 = cmean(x1_ref), cmean(x2_ref), cmean(x3_ref)

        # 3 -> 3 -> 3 squeeze/excite MLP on the VPU/EUP (deliberately no MXU).
        w1t = w1t_ref[...]                                     # (3, 3) = W1^T
        h = (w1t[0:1, :] * m1 + w1t[1:2, :] * m2 + w1t[2:3, :] * m3
             + b1_ref[...])                                    # (1, 3)
        h = jnp.maximum(h, 0.0)
        z = jnp.sum(w2_ref[...] * h, axis=1, keepdims=True) + b2_ref[...]
        att = jax.nn.sigmoid(z)                                # (3, 1)

        for c, xr in enumerate((x1_ref, x2_ref, x3_ref)):
            x = xr[...].astype(jnp.float32)
            a = att[c:c + 1, :]                                # (1, 1)
            o_ref[c] = jnp.maximum(jnp.maximum(a * x, 0.0) + x, 0.0)

    cost = pl.CostEstimate(
        flops=int(15 * N * D),
        transcendentals=3,
        bytes_accessed=int(3 * N * D * (x1.dtype.itemsize + 4)))

    return pl.pallas_call(
        kernel,
        out_shape=jax.ShapeDtypeStruct((C, N, D), jnp.float32),
        grid_spec=pltpu.PrefetchScalarGridSpec(
            num_scalar_prefetch=0,
            grid=(1,),
            in_specs=[
                pl.BlockSpec((N, D), lambda i: (0, 0)),        # x1 (full)
                pl.BlockSpec((N, D), lambda i: (0, 0)),        # x2
                pl.BlockSpec((N, D), lambda i: (0, 0)),        # x3
                pl.BlockSpec((C, C), lambda i: (0, 0)),        # W1^T
                pl.BlockSpec((1, C), lambda i: (0, 0)),        # b1 row
                pl.BlockSpec((C, C), lambda i: (0, 0)),        # W2
                pl.BlockSpec((C, 1), lambda i: (0, 0)),        # b2 col
            ],
            out_specs=pl.BlockSpec((C, N, D), lambda i: (0, 0, 0)),
        ),
        compiler_params=pltpu.CompilerParams(
            dimension_semantics=("arbitrary",),
            vmem_limit_bytes=44 << 20),
        cost_estimate=cost,
    )(x1, x2, x3,
      w1.T.astype(jnp.float32),
      b1.reshape(1, C).astype(jnp.float32),
      w2.astype(jnp.float32),
      b2.reshape(C, 1).astype(jnp.float32))


# ---------------------------------------------------------------------------
# Path B: tiled two-pass (both passes "parallel" -> uses both TCs on v7x)
# ---------------------------------------------------------------------------
def _tiled_forward(x1, x2, x3, w1, b1, w2, b2, *, tn=None):
    N, D = x1.shape
    align = _row_align(x1.dtype)
    auto_tn, vmem_limit = _pick_tile(N, D, x1.dtype)
    if tn is None:
        tn = auto_tn
    else:
        tn = min(int(tn), N)
        if tn < N:
            tn = max(align, (tn // align) * align)
    nt = pl.cdiv(N, tn)
    ragged = (N % tn) != 0
    use_slab = (tn % 8 == 0) and (tn > 8)

    # -------------------- pass 1: per-tile channel sums ---------------------
    def reduce_kernel(x1_ref, x2_ref, x3_ref, ps_ref):
        i = pl.program_id(0)

        def emit(mask_last):
            def csum(xr):
                x = xr[...].astype(jnp.float32)
                if mask_last:
                    rows = lax.broadcasted_iota(jnp.int32, (tn, 1), 0) + i * tn
                    x = jnp.where(rows < N, x, 0.0)
                if use_slab:
                    # elementwise VPU adds of 8-row slabs -> (8, D)
                    x = jnp.sum(x.reshape(tn // 8, 8, D), axis=0)
                return jnp.sum(jnp.sum(x, axis=1, keepdims=True),
                               axis=0, keepdims=True)          # (1, 1)

            s1, s2, s3 = csum(x1_ref), csum(x2_ref), csum(x3_ref)
            lane = lax.broadcasted_iota(jnp.int32, (8, 128), 1)
            blk = jnp.where(lane == 0, s1,
                            jnp.where(lane == 1, s2,
                                      jnp.where(lane == 2, s3, 0.0)))
            ps_ref[0] = blk                                     # (8, 128)

        if ragged:
            @pl.when(i == nt - 1)
            def _():
                emit(True)

            @pl.when(i != nt - 1)
            def _():
                emit(False)
        else:
            emit(False)

    psums = pl.pallas_call(
        reduce_kernel,
        out_shape=jax.ShapeDtypeStruct((nt, 8, 128), jnp.float32),
        grid_spec=pltpu.PrefetchScalarGridSpec(
            num_scalar_prefetch=0,
            grid=(nt,),
            in_specs=[pl.BlockSpec((tn, D), lambda i: (i, 0)),
                      pl.BlockSpec((tn, D), lambda i: (i, 0)),
                      pl.BlockSpec((tn, D), lambda i: (i, 0))],
            out_specs=pl.BlockSpec((1, 8, 128), lambda i: (i, 0, 0)),
        ),
        compiler_params=pltpu.CompilerParams(
            dimension_semantics=("parallel",),
            vmem_limit_bytes=vmem_limit),
        cost_estimate=pl.CostEstimate(
            flops=int(3 * N * D),
            transcendentals=0,
            bytes_accessed=int(3 * N * D * x1.dtype.itemsize)),
    )(x1, x2, x3)

    # --------------- tiny glue: 3 numbers -> 3x3 MLP -> att (3,) ------------
    sums = psums[:, 0, :C].sum(axis=0)                          # (3,)
    pooled = sums / jnp.float32(N * D)
    h = jnp.maximum(pooled @ w1.T.astype(jnp.float32)
                    + b1.astype(jnp.float32), 0.0)
    att = jax.nn.sigmoid(h @ w2.T.astype(jnp.float32)
                         + b2.astype(jnp.float32))              # (3,)
    att_row = jnp.zeros((1, 128), jnp.float32).at[0, :C].set(att)

    # -------------------- pass 2: out = relu(relu(a*x) + x) -----------------
    def apply_kernel(att_ref, x1_ref, x2_ref, x3_ref, o_ref):
        a = att_ref[...]                                        # (1, 128) resident
        for c, xr in enumerate((x1_ref, x2_ref, x3_ref)):
            x = xr[...].astype(jnp.float32)
            sc = a[0:1, c:c + 1]                                # (1, 1)
            o_ref[c] = jnp.maximum(jnp.maximum(sc * x, 0.0) + x, 0.0)

    out = pl.pallas_call(
        apply_kernel,
        out_shape=jax.ShapeDtypeStruct((C, N, D), jnp.float32),
        grid_spec=pltpu.PrefetchScalarGridSpec(
            num_scalar_prefetch=0,
            grid=(nt,),
            in_specs=[pl.BlockSpec((1, 128), lambda i: (0, 0)),   # att (resident)
                      pl.BlockSpec((tn, D), lambda i: (i, 0)),
                      pl.BlockSpec((tn, D), lambda i: (i, 0)),
                      pl.BlockSpec((tn, D), lambda i: (i, 0))],
            out_specs=pl.BlockSpec((C, tn, D), lambda i: (0, i, 0)),
        ),
        compiler_params=pltpu.CompilerParams(
            dimension_semantics=("parallel",),
            vmem_limit_bytes=vmem_limit),
        cost_estimate=pl.CostEstimate(
            flops=int(12 * N * D),
            transcendentals=0,
            bytes_accessed=int(3 * N * D * (x1.dtype.itemsize + 4))),
    )(att_row, x1, x2, x3)
    return out


# ---------------------------------------------------------------------------
# Public wrapper
# ---------------------------------------------------------------------------
def multiomics_attention(x1, x2, x3, w1, b1, w2, b2, *, tn=None):
    """x1/x2/x3: (N, D).  w1, w2: (3, 3) [out, in].  b1, b2: (3,).
    Returns (3, N, D) float32 == PyTorch forward([x1, x2, x3]).
    Passing `tn` forces the tiled two-pass path (used for testing)."""
    N, D = x1.shape
    assert x2.shape == (N, D) and x3.shape == (N, D)
    itemsize = jnp.dtype(x1.dtype).itemsize
    # Resident path if double-buffered inputs + f32 output fit comfortably.
    resident_bytes = 2 * 3 * N * D * (itemsize + 4)
    if tn is None and resident_bytes <= (36 << 20):
        return _resident_forward(x1, x2, x3, w1, b1, w2, b2)
    return _tiled_forward(x1, x2, x3, w1, b1, w2, b2, tn=tn)


# ---------------------------------------------------------------------------
# Pure-JAX reference (mirrors the PyTorch forward exactly)
# ---------------------------------------------------------------------------
def reference(x1, x2, x3, w1, b1, w2, b2):
    xm = jnp.stack([x1, x2, x3], axis=0).astype(jnp.float32)    # (3, N, D)
    pooled = jnp.mean(xm, axis=(1, 2))                          # (3,)
    h = jax.nn.relu(pooled @ w1.T + b1)
    a = jax.nn.sigmoid(h @ w2.T + b2)                           # (3,)
    y = jax.nn.relu(a[:, None, None] * xm)
    return jax.nn.relu(y + xm)


if __name__ == "__main__":
    key = jax.random.PRNGKey(0)
    k1, k2, k3, kw1, kb1, kw2, kb2, k4, k5, k6 = jax.random.split(key, 10)

    # PyTorch Linear-style uniform init, bound 1/sqrt(3).
    bound = 1.0 / (3.0 ** 0.5)
    w1 = jax.random.uniform(kw1, (3, 3), jnp.float32, -bound, bound)
    b1 = jax.random.uniform(kb1, (3,), jnp.float32, -bound, bound)
    w2 = jax.random.uniform(kw2, (3, 3), jnp.float32, -bound, bound)
    b2 = jax.random.uniform(kb2, (3,), jnp.float32, -bound, bound)

    # --- test 1: small shapes -> VMEM-resident single-pass path -------------
    N, D = 16, 128
    x1 = jax.random.normal(k1, (N, D), dtype=jnp.float32)
    x2 = jax.random.normal(k2, (N, D), dtype=jnp.float32)
    x3 = jax.random.normal(k3, (N, D), dtype=jnp.float32)

    out = jax.block_until_ready(multiomics_attention(x1, x2, x3, w1, b1, w2, b2))
    ref = reference(x1, x2, x3, w1, b1, w2, b2)
    assert out.shape == (3, N, D) and out.dtype == jnp.float32
    assert jnp.allclose(out, ref, atol=1e-4, rtol=1e-4), "resident-path mismatch"

    # --- test 2: ragged N, forced tiled two-pass path (reduce + apply) ------
    N2, D2 = 200, 256
    y1 = jax.random.normal(k4, (N2, D2), dtype=jnp.float32)
    y2 = jax.random.normal(k5, (N2, D2), dtype=jnp.float32)
    y3 = jax.random.normal(k6, (N2, D2), dtype=jnp.float32)

    out2 = jax.block_until_ready(
        multiomics_attention(y1, y2, y3, w1, b1, w2, b2, tn=64))
    ref2 = reference(y1, y2, y3, w1, b1, w2, b2)
    assert jnp.allclose(out2, ref2, atol=1e-4, rtol=1e-4), "tiled-path mismatch"

    print("KERNEL_OK")
</pallas_src>

<mosaic_0001>
module attributes {stable_mosaic.version = 11 : i64} {
  func.func @kernel(%arg0: i32, %arg1: memref<16x128xf32, #tpu.memory_space<vmem>>, %arg2: memref<16x128xf32, #tpu.memory_space<vmem>>, %arg3: memref<16x128xf32, #tpu.memory_space<vmem>>, %arg4: memref<3x3xf32, #tpu.memory_space<vmem>>, %arg5: memref<1x3xf32, #tpu.memory_space<vmem>>, %arg6: memref<3x3xf32, #tpu.memory_space<vmem>>, %arg7: memref<3x1xf32, #tpu.memory_space<vmem>>, %arg8: memref<3x16x128xf32, #tpu.memory_space<vmem>>) attributes {dimension_semantics = [#tpu.dimension_semantics<arbitrary>], iteration_bounds = array<i64: 1>, scalar_prefetch = 0 : i64, scratch_operands = 0 : i64, tpu.core_type = #tpu.core_type<tc>, window_params = [{pipeline_mode = #tpu.pipeline_mode<synchronous>, transform_indices = @transform_0, window_bounds = array<i64: 16, 128>}, {pipeline_mode = #tpu.pipeline_mode<synchronous>, transform_indices = @transform_1, window_bounds = array<i64: 16, 128>}, {pipeline_mode = #tpu.pipeline_mode<synchronous>, transform_indices = @transform_2, window_bounds = array<i64: 16, 128>}, {pipeline_mode = #tpu.pipeline_mode<synchronous>, transform_indices = @transform_3, window_bounds = array<i64: 3, 3>}, {pipeline_mode = #tpu.pipeline_mode<synchronous>, transform_indices = @transform_4, window_bounds = array<i64: 1, 3>}, {pipeline_mode = #tpu.pipeline_mode<synchronous>, transform_indices = @transform_5, window_bounds = array<i64: 3, 3>}, {pipeline_mode = #tpu.pipeline_mode<synchronous>, transform_indices = @transform_6, window_bounds = array<i64: 3, 1>}, {pipeline_mode = #tpu.pipeline_mode<synchronous>, transform_indices = @transform_7, window_bounds = array<i64: 3, 16, 128>}]} {
    %c0 = arith.constant 0 : index
    %c0_0 = arith.constant 0 : index
    %0 = vector.load %arg1[%c0, %c0_0] : memref<16x128xf32, #tpu.memory_space<vmem>>, vector<16x128xf32>
    %1 = vector.shape_cast %0 : vector<16x128xf32> to vector<2x8x128xf32>
    %cst = arith.constant dense<0.000000e+00> : vector<8x128xf32>
    %2 = vector.multi_reduction <add>, %1, %cst [0] : vector<2x8x128xf32> to vector<8x128xf32>
    %cst_1 = arith.constant dense<0.000000e+00> : vector<8xf32>
    %3 = vector.multi_reduction <add>, %2, %cst_1 [1] : vector<8x128xf32> to vector<8xf32>
    %4 = vector.shape_cast %3 : vector<8xf32> to vector<8x1xf32>
    %cst_2 = arith.constant dense<0.000000e+00> : vector<1xf32>
    %5 = vector.multi_reduction <add>, %4, %cst_2 [0] : vector<8x1xf32> to vector<1xf32>
    %6 = vector.shape_cast %5 : vector<1xf32> to vector<1x1xf32>
    %cst_3 = arith.constant 4.8828125E-4 : f32
    %7 = vector.broadcast %cst_3 : f32 to vector<1x1xf32>
    %8 = arith.mulf %6, %7 : vector<1x1xf32>
    %c0_4 = arith.constant 0 : index
    %c0_5 = arith.constant 0 : index
    %9 = vector.load %arg2[%c0_4, %c0_5] : memref<16x128xf32, #tpu.memory_space<vmem>>, vector<16x128xf32>
    %10 = vector.shape_cast %9 : vector<16x128xf32> to vector<2x8x128xf32>
    %cst_6 = arith.constant dense<0.000000e+00> : vector<8x128xf32>
    %11 = vector.multi_reduction <add>, %10, %cst_6 [0] : vector<2x8x128xf32> to vector<8x128xf32>
    %cst_7 = arith.constant dense<0.000000e+00> : vector<8xf32>
    %12 = vector.multi_reduction <add>, %11, %cst_7 [1] : vector<8x128xf32> to vector<8xf32>
    %13 = vector.shape_cast %12 : vector<8xf32> to vector<8x1xf32>
    %cst_8 = arith.constant dense<0.000000e+00> : vector<1xf32>
    %14 = vector.multi_reduction <add>, %13, %cst_8 [0] : vector<8x1xf32> to vector<1xf32>
    %15 = vector.shape_cast %14 : vector<1xf32> to vector<1x1xf32>
    %cst_9 = arith.constant 4.8828125E-4 : f32
    %16 = vector.broadcast %cst_9 : f32 to vector<1x1xf32>
    %17 = arith.mulf %15, %16 : vector<1x1xf32>
    %c0_10 = arith.constant 0 : index
    %c0_11 = arith.constant 0 : index
    %18 = vector.load %arg3[%c0_10, %c0_11] : memref<16x128xf32, #tpu.memory_space<vmem>>, vector<16x128xf32>
    %19 = vector.shape_cast %18 : vector<16x128xf32> to vector<2x8x128xf32>
    %cst_12 = arith.constant dense<0.000000e+00> : vector<8x128xf32>
    %20 = vector.multi_reduction <add>, %19, %cst_12 [0] : vector<2x8x128xf32> to vector<8x128xf32>
    %cst_13 = arith.constant dense<0.000000e+00> : vector<8xf32>
    %21 = vector.multi_reduction <add>, %20, %cst_13 [1] : vector<8x128xf32> to vector<8xf32>
    %22 = vector.shape_cast %21 : vector<8xf32> to vector<8x1xf32>
    %cst_14 = arith.constant dense<0.000000e+00> : vector<1xf32>
    %23 = vector.multi_reduction <add>, %22, %cst_14 [0] : vector<8x1xf32> to vector<1xf32>
    %24 = vector.shape_cast %23 : vector<1xf32> to vector<1x1xf32>
    %cst_15 = arith.constant 4.8828125E-4 : f32
    %25 = vector.broadcast %cst_15 : f32 to vector<1x1xf32>
    %26 = arith.mulf %24, %25 : vector<1x1xf32>
    %c0_16 = arith.constant 0 : index
    %c0_17 = arith.constant 0 : index
    %27 = vector.load %arg4[%c0_16, %c0_17] : memref<3x3xf32, #tpu.memory_space<vmem>>, vector<3x3xf32>
    %28 = vector.extract_strided_slice %27 {offsets = [0, 0], sizes = [1, 3], strides = [1, 1]} : vector<3x3xf32> to vector<1x3xf32>
    %29 = vector.broadcast %8 : vector<1x1xf32> to vector<1x3xf32>
    %30 = arith.mulf %28, %29 : vector<1x3xf32>
    %31 = vector.extract_strided_slice %27 {offsets = [1, 0], sizes = [1, 3], strides = [1, 1]} : vector<3x3xf32> to vector<1x3xf32>
    %32 = vector.broadcast %17 : vector<1x1xf32> to vector<1x3xf32>
    %33 = arith.mulf %31, %32 : vector<1x3xf32>
    %34 = arith.addf %30, %33 : vector<1x3xf32>
    %35 = vector.extract_strided_slice %27 {offsets = [2, 0], sizes = [1, 3], strides = [1, 1]} : vector<3x3xf32> to vector<1x3xf32>
    %36 = vector.broadcast %26 : vector<1x1xf32> to vector<1x3xf32>
    %37 = arith.mulf %35, %36 : vector<1x3xf32>
    %38 = arith.addf %34, %37 : vector<1x3xf32>
    %c0_18 = arith.constant 0 : index
    %c0_19 = arith.constant 0 : index
    %39 = vector.load %arg5[%c0_18, %c0_19] : memref<1x3xf32, #tpu.memory_space<vmem>>, vector<1x3xf32>
    %40 = arith.addf %38, %39 : vector<1x3xf32>
    %cst_20 = arith.constant 0.000000e+00 : f32
    %41 = vector.broadcast %cst_20 : f32 to vector<1x3xf32>
    %42 = arith.maximumf %40, %41 : vector<1x3xf32>
    %c0_21 = arith.constant 0 : index
    %c0_22 = arith.constant 0 : index
    %43 = vector.load %arg6[%c0_21, %c0_22] : memref<3x3xf32, #tpu.memory_space<vmem>>, vector<3x3xf32>
    %44 = vector.broadcast %42 : vector<1x3xf32> to vector<3x3xf32>
    %45 = arith.mulf %43, %44 : vector<3x3xf32>
    %cst_23 = arith.constant dense<0.000000e+00> : vector<3xf32>
    %46 = vector.multi_reduction <add>, %45, %cst_23 [1] : vector<3x3xf32> to vector<3xf32>
    %47 = vector.shape_cast %46 : vector<3xf32> to vector<3x1xf32>
    %c0_24 = arith.constant 0 : index
    %c0_25 = arith.constant 0 : index
    %48 = vector.load %arg7[%c0_24, %c0_25] : memref<3x1xf32, #tpu.memory_space<vmem>>, vector<3x1xf32>
    %49 = arith.addf %47, %48 : vector<3x1xf32>
    %50 = arith.negf %49 : vector<3x1xf32>
    %51 = math.exp %50 : vector<3x1xf32>
    %cst_26 = arith.constant 1.000000e+00 : f32
    %52 = vector.broadcast %cst_26 : f32 to vector<3x1xf32>
    %53 = arith.addf %52, %51 : vector<3x1xf32>
    %54 = arith.divf %52, %53 : vector<3x1xf32>
    %c0_27 = arith.constant 0 : index
    %c0_28 = arith.constant 0 : index
    %55 = vector.load %arg1[%c0_27, %c0_28] : memref<16x128xf32, #tpu.memory_space<vmem>>, vector<16x128xf32>
    %56 = vector.extract_strided_slice %54 {offsets = [0, 0], sizes = [1, 1], strides = [1, 1]} : vector<3x1xf32> to vector<1x1xf32>
    %57 = vector.broadcast %56 : vector<1x1xf32> to vector<16x128xf32>
    %58 = arith.mulf %57, %55 : vector<16x128xf32>
    %cst_29 = arith.constant 0.000000e+00 : f32
    %59 = vector.broadcast %cst_29 : f32 to vector<16x128xf32>
    %60 = arith.maximumf %58, %59 : vector<16x128xf32>
    %61 = arith.addf %60, %55 : vector<16x128xf32>
    %cst_30 = arith.constant 0.000000e+00 : f32
    %62 = vector.broadcast %cst_30 : f32 to vector<16x128xf32>
    %63 = arith.maximumf %61, %62 : vector<16x128xf32>
    %c0_31 = arith.constant 0 : index
    %c0_32 = arith.constant 0 : index
    %c0_33 = arith.constant 0 : index
    %64 = vector.load %arg8[%c0_31, %c0_32, %c0_33] : memref<3x16x128xf32, #tpu.memory_space<vmem>>, vector<1x16x128xf32>
    %65 = vector.shape_cast %64 : vector<1x16x128xf32> to vector<16x128xf32>
    %66 = vector.shape_cast %63 : vector<16x128xf32> to vector<1x16x128xf32>
    tpu.vector_store %arg8[%c0_31, %c0_32, %c0_33], %66 {strides = array<i32>} : memref<3x16x128xf32, #tpu.memory_space<vmem>>, vector<1x16x128xf32>,
    %c0_34 = arith.constant 0 : index
    %c0_35 = arith.constant 0 : index
    %67 = vector.load %arg2[%c0_34, %c0_35] : memref<16x128xf32, #tpu.memory_space<vmem>>, vector<16x128xf32>
    %68 = vector.extract_strided_slice %54 {offsets = [1, 0], sizes = [1, 1], strides = [1, 1]} : vector<3x1xf32> to vector<1x1xf32>
    %69 = vector.broadcast %68 : vector<1x1xf32> to vector<16x128xf32>
    %70 = arith.mulf %69, %67 : vector<16x128xf32>
    %cst_36 = arith.constant 0.000000e+00 : f32
    %71 = vector.broadcast %cst_36 : f32 to vector<16x128xf32>
    %72 = arith.maximumf %70, %71 : vector<16x128xf32>
    %73 = arith.addf %72, %67 : vector<16x128xf32>
    %cst_37 = arith.constant 0.000000e+00 : f32
    %74 = vector.broadcast %cst_37 : f32 to vector<16x128xf32>
    %75 = arith.maximumf %73, %74 : vector<16x128xf32>
    %c1 = arith.constant 1 : index
    %c0_38 = arith.constant 0 : index
    %c0_39 = arith.constant 0 : index
    %76 = vector.load %arg8[%c1, %c0_38, %c0_39] : memref<3x16x128xf32, #tpu.memory_space<vmem>>, vector<1x16x128xf32>
    %77 = vector.shape_cast %76 : vector<1x16x128xf32> to vector<16x128xf32>
    %78 = vector.shape_cast %75 : vector<16x128xf32> to vector<1x16x128xf32>
    tpu.vector_store %arg8[%c1, %c0_38, %c0_39], %78 {strides = array<i32>} : memref<3x16x128xf32, #tpu.memory_space<vmem>>, vector<1x16x128xf32>,
    %c0_40 = arith.constant 0 : index
    %c0_41 = arith.constant 0 : index
    %79 = vector.load %arg3[%c0_40, %c0_41] : memref<16x128xf32, #tpu.memory_space<vmem>>, vector<16x128xf32>
    %80 = vector.extract_strided_slice %54 {offsets = [2, 0], sizes = [1, 1], strides = [1, 1]} : vector<3x1xf32> to vector<1x1xf32>
    %81 = vector.broadcast %80 : vector<1x1xf32> to vector<16x128xf32>
    %82 = arith.mulf %81, %79 : vector<16x128xf32>
    %cst_42 = arith.constant 0.000000e+00 : f32
    %83 = vector.broadcast %cst_42 : f32 to vector<16x128xf32>
    %84 = arith.maximumf %82, %83 : vector<16x128xf32>
    %85 = arith.addf %84, %79 : vector<16x128xf32>
    %cst_43 = arith.constant 0.000000e+00 : f32
    %86 = vector.broadcast %cst_43 : f32 to vector<16x128xf32>
    %87 = arith.maximumf %85, %86 : vector<16x128xf32>
    %c2 = arith.constant 2 : index
    %c0_44 = arith.constant 0 : index
    %c0_45 = arith.constant 0 : index
    %88 = vector.load %arg8[%c2, %c0_44, %c0_45] : memref<3x16x128xf32, #tpu.memory_space<vmem>>, vector<1x16x128xf32>
    %89 = vector.shape_cast %88 : vector<1x16x128xf32> to vector<16x128xf32>
    %90 = vector.shape_cast %87 : vector<16x128xf32> to vector<1x16x128xf32>
    tpu.vector_store %arg8[%c2, %c0_44, %c0_45], %90 {strides = array<i32>} : memref<3x16x128xf32, #tpu.memory_space<vmem>>, vector<1x16x128xf32>,
    return
  }
  func.func @transform_0(%arg0: i32) -> (i32, i32) {
    %c0_i32 = arith.constant 0 : i32
    %c0_i32_0 = arith.constant 0 : i32
    %c0_i32_1 = arith.constant 0 : i32
    return %c0_i32, %c0_i32_0 : i32, i32
  }
  func.func @transform_1(%arg0: i32) -> (i32, i32) {
    %c0_i32 = arith.constant 0 : i32
    %c0_i32_0 = arith.constant 0 : i32
    %c0_i32_1 = arith.constant 0 : i32
    return %c0_i32, %c0_i32_0 : i32, i32
  }
  func.func @transform_2(%arg0: i32) -> (i32, i32) {
    %c0_i32 = arith.constant 0 : i32
    %c0_i32_0 = arith.constant 0 : i32
    %c0_i32_1 = arith.constant 0 : i32
    return %c0_i32, %c0_i32_0 : i32, i32
  }
  func.func @transform_3(%arg0: i32) -> (i32, i32) {
    %c0_i32 = arith.constant 0 : i32
    %c0_i32_0 = arith.constant 0 : i32
    %c0_i32_1 = arith.constant 0 : i32
    return %c0_i32, %c0_i32_0 : i32, i32
  }
  func.func @transform_4(%arg0: i32) -> (i32, i32) {
    %c0_i32 = arith.constant 0 : i32
    %c0_i32_0 = arith.constant 0 : i32
    %c0_i32_1 = arith.constant 0 : i32
    return %c0_i32, %c0_i32_0 : i32, i32
  }
  func.func @transform_5(%arg0: i32) -> (i32, i32) {
    %c0_i32 = arith.constant 0 : i32
    %c0_i32_0 = arith.constant 0 : i32
    %c0_i32_1 = arith.constant 0 : i32
    return %c0_i32, %c0_i32_0 : i32, i32
  }
  func.func @transform_6(%arg0: i32) -> (i32, i32) {
    %c0_i32 = arith.constant 0 : i32
    %c0_i32_0 = arith.constant 0 : i32
    %c0_i32_1 = arith.constant 0 : i32
    return %c0_i32, %c0_i32_0 : i32, i32
  }
  func.func @transform_7(%arg0: i32) -> (i32, i32, i32) {
    %c0_i32 = arith.constant 0 : i32
    %c0_i32_0 = arith.constant 0 : i32
    %c0_i32_1 = arith.constant 0 : i32
    %c0_i32_2 = arith.constant 0 : i32
    return %c0_i32, %c0_i32_0, %c0_i32_1 : i32, i32, i32
  }
}

</mosaic_0001>

<llo_original>
// kernel: tpu_custom_call.1
$region0: #{tpu_custom_call.1}
  #allocation0 [shape = 'u32[]', space=smem, size = 0x4, offset = 0x4, fixed_abs, tag = 'smem constant byte address 0x4 - core index']
  #allocation1 [shape = 'u32[144,128]{1,0:T(1,128)}', space=vmem, size = 0x12000, scoped, tag = 'internal scratch']
  %s0 = inlined_call_operand.hbm [shape: f32[16,128], index: 0, kind: input, shape index: {}]
  %s1 = inlined_call_operand.hbm [shape: f32[16,128], index: 1, kind: input, shape index: {}]
  %s2 = inlined_call_operand.hbm [shape: f32[16,128], index: 2, kind: input, shape index: {}]
  %s3 = inlined_call_operand.vmem [shape: f32[3,3], index: 3, kind: input, shape index: {}]
  %s4 = inlined_call_operand.vmem [shape: f32[1,3], index: 4, kind: input, shape index: {}]
  %s5 = inlined_call_operand.vmem [shape: f32[3,3], index: 5, kind: input, shape index: {}]
  %s6 = inlined_call_operand.vmem [shape: f32[3,1], index: 6, kind: input, shape index: {}]
  %s7 = inlined_call_operand.hbm [shape: f32[3,16,128], index: 7, kind: output, shape index: {}]
  %s8 = sld [smem:[#allocation0]]
  $region50: #{tpu_custom_call.1} parent=0
    _
  %s10 = ssub.s32 1, %s8
  %s11 = scalar_select 0, %s10, %s8
  $region1: #{tpu_custom_call.1} parent=0
    #allocation2 [shape = 'u8[8192]{0}', space=vmem, size = 0x2000, scoped, tag = 'input window, operand 0, single buffered']
    #allocation3 [shape = 's32[1]{0}', space=sflag, size = 0x4, scoped, tag = 'scoped memory for tpu_custom_call.1']
    #allocation4 [shape = 's32[1]{0}', space=sflag, size = 0x4, scoped, tag = 'scoped memory for tpu_custom_call.1']
    #allocation5 [shape = 'u8[8192]{0}', space=vmem, size = 0x2000, scoped, tag = 'input window, operand 1, single buffered']
    #allocation6 [shape = 's32[1]{0}', space=sflag, size = 0x4, scoped, tag = 'scoped memory for tpu_custom_call.1']
    #allocation7 [shape = 'u8[8192]{0}', space=vmem, size = 0x2000, scoped, tag = 'input window, operand 2, single buffered']
    #allocation8 [shape = 'u8[24576]{0}', space=vmem, size = 0x6000, scoped, tag = 'output window, operand 0, single buffered']
    %12 = vsyncpa [#allocation3], 0
    %13 = vsyncpa [#allocation6], 0
    %14 = vsyncpa [#allocation4], 0
    // Predicated region
    $region2: #{tpu_custom_call.1} parent=1 // pred_check
      _
    $region3: #{tpu_custom_call.1} parent=1 // pred_check_branch
      %16 = sbr.rel (0) target = $region5
    $region4: #{tpu_custom_call.1} parent=1 // pred_region
      %s18 = ssub.s32 256, 256
      %19 = vsyncadd [#allocation3], %s18
      %s20 = sshll.u32 [#allocation2], 4
      %s21 = int_to_ptr.vmem [resolvable:$true] %s20
      %26 = dma.hbm_to_vmem [thread:$0]  %s0, 256, %s21, [#allocation3], 128, 128, 8
    $region5: #{tpu_custom_call.1} parent=1 // pred_fallthru
      _
    // Predicated region
    $region6: #{tpu_custom_call.1} parent=1 // pred_check
      _
    $region7: #{tpu_custom_call.1} parent=1 // pred_check_branch
      %28 = sbr.rel (0) target = $region9
    $region8: #{tpu_custom_call.1} parent=1 // pred_region
      %s30 = ssub.s32 256, 256
      %31 = vsyncadd [#allocation6], %s30
      %s32 = sshll.u32 [#allocation5], 4
      %s33 = int_to_ptr.vmem [resolvable:$true] %s32
      %38 = dma.hbm_to_vmem [thread:$0]  %s1, 256, %s33, [#allocation6], 128, 128, 8
    $region9: #{tpu_custom_call.1} parent=1 // pred_fallthru
      _
    // Predicated region
    $region10: #{tpu_custom_call.1} parent=1 // pred_check
      _
    $region11: #{tpu_custom_call.1} parent=1 // pred_check_branch
      %40 = sbr.rel (0) target = $region13
    $region12: #{tpu_custom_call.1} parent=1 // pred_region
      %s42 = ssub.s32 256, 256
      %43 = vsyncadd [#allocation6], %s42
      %s44 = sshll.u32 [#allocation7], 4
      %s45 = int_to_ptr.vmem [resolvable:$true] %s44
      %50 = dma.hbm_to_vmem [thread:$0]  %s2, 256, %s45, [#allocation6], 128, 128, 8
    $region13: #{tpu_custom_call.1} parent=1 // pred_fallthru
      _
    // Predicated region
    $region14: #{tpu_custom_call.1} parent=1 // pred_check
      _
    $region15: #{tpu_custom_call.1} parent=1 // pred_check_branch
      %52 = sbr.rel (0) target = $region17
    $region16: #{tpu_custom_call.1} parent=1 // pred_region
      _
    $region17: #{tpu_custom_call.1} parent=1 // pred_fallthru
      _
    // Predicated region
    $region18: #{tpu_custom_call.1} parent=1 // pred_check
      _
    $region19: #{tpu_custom_call.1} parent=1 // pred_check_branch
      %54 = sbr.rel (0) target = $region21
    $region20: #{tpu_custom_call.1} parent=1 // pred_region
      _
    $region21: #{tpu_custom_call.1} parent=1 // pred_fallthru
      _
    // Predicated region
    $region22: #{tpu_custom_call.1} parent=1 // pred_check
      _
    $region23: #{tpu_custom_call.1} parent=1 // pred_check_branch
      %56 = sbr.rel (0) target = $region25
    $region24: #{tpu_custom_call.1} parent=1 // pred_region
      _
    $region25: #{tpu_custom_call.1} parent=1 // pred_fallthru
      _
    // Predicated region
    $region26: #{tpu_custom_call.1} parent=1 // pred_check
      _
    $region27: #{tpu_custom_call.1} parent=1 // pred_check_branch
      %58 = sbr.rel (0) target = $region29
    $region28: #{tpu_custom_call.1} parent=1 // pred_region
      _
    $region29: #{tpu_custom_call.1} parent=1 // pred_fallthru
      _
    // Predicated region
    $region30: #{tpu_custom_call.1} parent=1 // pred_check
      _
    $region31: #{tpu_custom_call.1} parent=1 // pred_check_branch
      %60 = sbr.rel (0) target = $region33
    $region32: #{tpu_custom_call.1} parent=1 // pred_region
      %61 = dma.done [#allocation3], 256
    $region33: #{tpu_custom_call.1} parent=1 // pred_fallthru
      _
    // Predicated region
    $region34: #{tpu_custom_call.1} parent=1 // pred_check
      _
    $region35: #{tpu_custom_call.1} parent=1 // pred_check_branch
      %63 = sbr.rel (0) target = $region37
    $region36: #{tpu_custom_call.1} parent=1 // pred_region
      %64 = dma.done [#allocation6], 256
    $region37: #{tpu_custom_call.1} parent=1 // pred_fallthru
      _
    // Predicated region
    $region38: #{tpu_custom_call.1} parent=1 // pred_check
      _
    $region39: #{tpu_custom_call.1} parent=1 // pred_check_branch
      %66 = sbr.rel (0) target = $region41
    $region40: #{tpu_custom_call.1} parent=1 // pred_region
      %67 = dma.done [#allocation6], 256
    $region41: #{tpu_custom_call.1} parent=1 // pred_fallthru
      _
    %v68 = vld [vmem:[#allocation2] sm:$0xff]
    %v69 = vld [vmem:[#allocation2 + $0x8] sm:$0xff]
    %v70 = vadd.f32 %v68, %v69
    %71 = vadd.xlane.f32.xlu0 %v70
    %v72 = vpop.xlane.xlu0 %71
    %v73 = vrot.slane %v72, 4
    %v74 = vadd.f32 %v72, %v73
    %v75 = vrot.slane %v74, 2
    %v76 = vadd.f32 %v74, %v75
    %v77 = vrot.slane %v76, 1
    %v78 = vadd.f32 %v76, %v77
    %v79 = vmul.f32 %v78, 0.00048828125
    %v80 = vld [vmem:[#allocation5] sm:$0xff]
    %v81 = vld [vmem:[#allocation5 + $0x8] sm:$0xff]
    %v82 = vadd.f32 %v80, %v81
    %83 = vadd.xlane.f32.xlu0 %v82
    %v84 = vpop.xlane.xlu0 %83
    %v85 = vrot.slane %v84, 4
    %v86 = vadd.f32 %v84, %v85
    %v87 = vrot.slane %v86, 2
    %v88 = vadd.f32 %v86, %v87
    %v89 = vrot.slane %v88, 1
    %v90 = vadd.f32 %v88, %v89
    %v91 = vmul.f32 %v90, 0.00048828125
    %v92 = vld [vmem:[#allocation7] sm:$0xff]
    %v93 = vld [vmem:[#allocation7 + $0x8] sm:$0xff]
    %v94 = vadd.f32 %v92, %v93
    %95 = vadd.xlane.f32.xlu0 %v94
    %v96 = vpop.xlane.xlu0 %95
    %v97 = vrot.slane %v96, 4
    %v98 = vadd.f32 %v96, %v97
    %v99 = vrot.slane %v98, 2
    %v100 = vadd.f32 %v98, %v99
    %v101 = vrot.slane %v100, 1
    %v102 = vadd.f32 %v100, %v101
    %v103 = vmul.f32 %v102, 0.00048828125
    %v104 = vld [vmem:[%s3] sm:$0x7]
    %v105 = vmul.f32 %v104, %v79
    %v106 = vmul.f32 %v104, %v91
    %v108 = vrot.slane %v106, 1
    %v110 = vadd.f32 %v105, %v108
    %v111 = vmul.f32 %v104, %v103
    %v113 = vrot.slane %v111, 2
    %v115 = vadd.f32 %v110, %v113
    %v116 = vld [vmem:[%s4] sm:$0x1]
    %v117 = vadd.f32 %v115, %v116
    %v118 = vmax.f32 %v117, 0.0
    %v119 = vld [vmem:[%s5] sm:$0x7]
    %v120 = vlaneseq
    %v121 = vshrl.u32 %v120, 7
    %v122 = vsub.s32 0, %v121
    %v123 = vrot.slane %v118, %v122
    %v124 = vmul.f32 %v119, %v123
    %vm125 = vcmask 18432
    %v126 = vsel %vm125, %v124, 0.0
    %127 = vadd.xlane.f32.xlu0 %v126
    %v128 = vpop.xlane.xlu0 %127
    %v129 = vld [vmem:[%s6] sm:$0x7]
    %v130 = vadd.f32 %v128, %v129
    %v131 = vxor.u32 %v130, 2147483648
    %v132 = vmul.f32 %v131, 1.442695
    %v133 = vpow.pop %v132
    %v134 = vadd.f32 %v133, 1.0
    %v135 = vrcp.pop %v134
    %v136 = vmul.f32 1.0, %v135
    %s138 = vtos %v136
    %v139 = vstv %s138
    %v141 = vmul.f32 %v139, %v68
    %v142 = vmul.f32 %v139, %v69
    %v143 = vmax.f32 %v141, 0.0
    %v144 = vmax.f32 %v142, 0.0
    %v145 = vadd.f32 %v143, %v68
    %v146 = vadd.f32 %v144, %v69
    %v147 = vmax.f32 %v145, 0.0
    %v148 = vmax.f32 %v146, 0.0
    %149 = vst [vmem:[#allocation8] sm:$0xff] %v147
    %150 = vst [vmem:[#allocation8 + $0x8] sm:$0xff] %v148
    %v151 = vld [vmem:[#allocation5] sm:$0xff]
    %v152 = vld [vmem:[#allocation5 + $0x8] sm:$0xff]
    %v153 = vrot.slane %v136, 1
    %s154 = vtos %v153
    %v155 = vstv %s154
    %v157 = vmul.f32 %v155, %v151
    %v158 = vmul.f32 %v155, %v152
    %v159 = vmax.f32 %v157, 0.0
    %v160 = vmax.f32 %v158, 0.0
    %v161 = vadd.f32 %v159, %v151
    %v162 = vadd.f32 %v160, %v152
    %v163 = vmax.f32 %v161, 0.0
    %v164 = vmax.f32 %v162, 0.0
    %s165 = scalar_lea.vmem [#allocation8], 16
    %166 = vst [vmem:[%s165] sm:$0xff] %v163
    %167 = vst [vmem:[%s165 + $0x8] sm:$0xff] %v164
    %v168 = vld [vmem:[#allocation7] sm:$0xff]
    %v169 = vld [vmem:[#allocation7 + $0x8] sm:$0xff]
    %v170 = vrot.slane %v136, 2
    %s171 = vtos %v170
    %v172 = vstv %s171
    %v174 = vmul.f32 %v172, %v168
    %v175 = vmul.f32 %v172, %v169
    %v176 = vmax.f32 %v174, 0.0
    %v177 = vmax.f32 %v175, 0.0
    %v178 = vadd.f32 %v176, %v168
    %v179 = vadd.f32 %v177, %v169
    %v180 = vmax.f32 %v178, 0.0
    %v181 = vmax.f32 %v179, 0.0
    %s182 = scalar_lea.vmem [#allocation8], 32
    %183 = vst [vmem:[%s182] sm:$0xff] %v180
    %184 = vst [vmem:[%s182 + $0x8] sm:$0xff] %v181
    // Predicated region
    $region42: #{tpu_custom_call.1} parent=1 // pred_check
      _
    $region43: #{tpu_custom_call.1} parent=1 // pred_check_branch
      %186 = sbr.rel (0) target = $region45
    $region44: #{tpu_custom_call.1} parent=1 // pred_region
      %s188 = ssub.s32 768, 768
      %189 = vsyncadd [#allocation4], %s188
      %s190 = sshll.u32 [#allocation8], 4
      %s191 = int_to_ptr.vmem [resolvable:$true] %s190
      %196 = dma.vmem_to_hbm [thread:$0]  %s191, 768, %s7, [#allocation4], 128, 128, 8
    $region45: #{tpu_custom_call.1} parent=1 // pred_fallthru
      _
    // Predicated region
    $region46: #{tpu_custom_call.1} parent=1 // pred_check
      _
    $region47: #{tpu_custom_call.1} parent=1 // pred_check_branch
      %198 = sbr.rel (0) target = $region49
    $region48: #{tpu_custom_call.1} parent=1 // pred_region
      %199 = dma.done [#allocation4], 768
    $region49: #{tpu_custom_call.1} parent=1 // pred_fallthru
      _
    %200 = vsyncpa [#allocation3], 1
    %201 = vsyncpa [#allocation6], 1
    %202 = vsyncpa [#allocation4], 1

</llo_original>
